<compile_context>
chip_gen: v5e
topology: v5e:2x2
jax: 0.10.0
libtpu: 0.0.40
codegen_flags: <defaults>
</compile_context>

<pallas_src>
import jax
import jax.numpy as jnp
from jax.experimental import pallas as pl
from jax.experimental.pallas import tpu as pltpu

_LANE = 128                              # vreg lane width
_SUBLANE = 8                             # f32 sublanes per vreg
_MAX_COLS = 512 * _LANE                  # cap flattened row width (<=256 KiB/row f32)
_TARGET_BLOCK_BYTES = 4 * 1024 * 1024    # ~4 MiB blocks; 2(in)+2(out) buffers ~16 MiB
_VMEM_LIMIT_BYTES = 32 * 1024 * 1024     # raise v5e's 16 MiB default; safe on v6e/v7x


def _copy_kernel(x_ref, o_ref):
    # forward(x) = x : pure tile copy
    o_ref[...] = x_ref[...]


def _lane_dense_2d(x: jax.Array) -> jax.Array:
    """Flatten to (rows, cols) with cols a multiple of 128 whenever possible."""
    t = x.size
    if t > 0 and t % _LANE == 0:
        groups = t // _LANE
        # Prefer rows >= 8 (fill sublanes) while keeping cols a multiple of 128.
        max_k = max(1, min(groups, groups // _SUBLANE, _MAX_COLS // _LANE))
        k = max_k
        while groups % k:
            k -= 1
        cols = _LANE * k
        return x.reshape(t // cols, cols)
    # Fallback (element count not a multiple of 128): keep trailing dim as lanes.
    if x.ndim == 0:
        return x.reshape(1, 1)
    if x.ndim == 1:
        return x.reshape(1, -1)
    return x.reshape(-1, x.shape[-1])


def identity_pallas(x: jax.Array) -> jax.Array:
    """Tuned Pallas copy kernel: returns a freshly materialized copy of x."""
    orig_shape = x.shape
    x2 = _lane_dense_2d(x)
    m, n = x2.shape
    itemsize = x2.dtype.itemsize
    pack = max(1, 4 // itemsize)          # sublane packing: bf16 -> 2, int8/fp8 -> 4
    sub_align = _SUBLANE * pack           # row-tile alignment for packed vreg tiling

    # Column tile: full width if affordable, otherwise a 128-aligned chunk.
    if n <= _LANE or n * itemsize * sub_align <= _TARGET_BLOCK_BYTES:
        tn = n
    else:
        tn = max(
            _LANE,
            min(n, (_TARGET_BLOCK_BYTES // (sub_align * itemsize)) // _LANE * _LANE),
        )

    # Row tile: byte-budgeted (~4 MiB per block), aligned to the packed tiling.
    tm = min(m, max(1, _TARGET_BLOCK_BYTES // max(1, tn * itemsize)))
    if tm >= sub_align:
        tm = (tm // sub_align) * sub_align
    # v7x megacore: prefer >=2 balanced row blocks when that is cheap.
    if tm == m and tn == n and m >= 2 * sub_align:
        half = -(-((m + 1) // 2) // sub_align) * sub_align
        tm = min(m, half)

    grid = (pl.cdiv(m, tm), pl.cdiv(n, tn))

    out2 = pl.pallas_call(
        _copy_kernel,
        out_shape=jax.ShapeDtypeStruct((m, n), x2.dtype),
        grid_spec=pltpu.PrefetchScalarGridSpec(
            num_scalar_prefetch=0,
            grid=grid,
            in_specs=[pl.BlockSpec((tm, tn), lambda i, j: (i, j))],
            out_specs=pl.BlockSpec((tm, tn), lambda i, j: (i, j)),
        ),
        compiler_params=pltpu.CompilerParams(
            dimension_semantics=("parallel", "parallel"),
            vmem_limit_bytes=_VMEM_LIMIT_BYTES,
        ),
    )(x2)
    return out2.reshape(orig_shape)


def identity(x: jax.Array) -> jax.Array:
    """Identity.forward(x) = x.  Zero HBM traffic: return the input unchanged.

    (Alternative if a kernel output buffer is required: pass
    input_output_aliases={0: 0} to pl.pallas_call and donate the input.)
    """
    return x


if __name__ == "__main__":
    key = jax.random.PRNGKey(0)
    # Small NCHW input consistent with a typical conv-net tensor.
    x = jax.random.normal(key, (2, 4, 16, 16), dtype=jnp.float32)

    # Preferred forward path: literally the input, no copy.
    y_fast = identity(x)
    assert y_fast is x

    # Pallas kernel path (explicit materialized copy), run once.
    y = identity_pallas(x)
    jax.block_until_ready(y)

    assert y.shape == x.shape and y.dtype == x.dtype
    assert bool(jnp.all(y == x))
    print("KERNEL_OK")
</pallas_src>

<mosaic_0001>
module attributes {stable_mosaic.version = 11 : i64} {
  func.func @_copy_kernel(%arg0: i32, %arg1: i32, %arg2: memref<8x256xf32, #tpu.memory_space<vmem>>, %arg3: memref<8x256xf32, #tpu.memory_space<vmem>>) attributes {dimension_semantics = [#tpu.dimension_semantics<parallel>, #tpu.dimension_semantics<parallel>], iteration_bounds = array<i64: 1, 1>, scalar_prefetch = 0 : i64, scratch_operands = 0 : i64, tpu.core_type = #tpu.core_type<tc>, window_params = [{transform_indices = @transform_0, window_bounds = array<i64: 8, 256>}, {transform_indices = @transform_1, window_bounds = array<i64: 8, 256>}]} {
    %c0 = arith.constant 0 : index
    %c0_0 = arith.constant 0 : index
    %0 = vector.load %arg2[%c0, %c0_0] : memref<8x256xf32, #tpu.memory_space<vmem>>, vector<8x256xf32>
    %c0_1 = arith.constant 0 : index
    %c0_2 = arith.constant 0 : index
    %1 = vector.load %arg3[%c0_1, %c0_2] : memref<8x256xf32, #tpu.memory_space<vmem>>, vector<8x256xf32>
    tpu.vector_store %arg3[%c0_1, %c0_2], %0 {strides = array<i32>} : memref<8x256xf32, #tpu.memory_space<vmem>>, vector<8x256xf32>,
    return
  }
  func.func @transform_0(%arg0: i32, %arg1: i32) -> (i32, i32) {
    %c0_i32 = arith.constant 0 : i32
    return %arg0, %arg1 : i32, i32
  }
  func.func @transform_1(%arg0: i32, %arg1: i32) -> (i32, i32) {
    %c0_i32 = arith.constant 0 : i32
    return %arg0, %arg1 : i32, i32
  }
}

</mosaic_0001>

<llo_original>
// kernel: tpu_custom_call.1
$region0: #{tpu_custom_call.1}
  #allocation0 [shape = 'u32[]', space=smem, size = 0x4, offset = 0x4, fixed_abs, tag = 'smem constant byte address 0x4 - core index']
  #allocation1 [shape = 'u32[72,128]{1,0:T(1,128)}', space=vmem, size = 0x9000, scoped, tag = 'internal scratch']
  %s0 = inlined_call_operand.hbm [shape: f32[8,256], index: 0, kind: input, shape index: {}]
  %s1 = inlined_call_operand.hbm [shape: f32[8,256], index: 1, kind: output, shape index: {}]
  %s2 = sld [smem:[#allocation0]]
  $region18: #{tpu_custom_call.1} parent=0
    _
  %s4 = ssub.s32 1, %s2
  %s5 = scalar_select 0, %s4, %s2
  $region1: #{tpu_custom_call.1} parent=0
    #allocation2 [shape = 'u8[8192]{0}', space=vmem, size = 0x2000, scoped, tag = 'input window, operand 0, single buffered']
    #allocation3 [shape = 's32[1]{0}', space=sflag, size = 0x4, scoped, tag = 'scoped memory for tpu_custom_call.1']
    #allocation4 [shape = 's32[1]{0}', space=sflag, size = 0x4, scoped, tag = 'scoped memory for tpu_custom_call.1']
    #allocation5 [shape = 'u8[8192]{0}', space=vmem, size = 0x2000, scoped, tag = 'output window, operand 0, single buffered']
    %6 = vsyncpa [#allocation3], 0
    %7 = vsyncpa [#allocation4], 0
    // Predicated region
    $region2: #{tpu_custom_call.1} parent=1 // pred_check
      _
    $region3: #{tpu_custom_call.1} parent=1 // pred_check_branch
      %9 = sbr.rel (0) target = $region5
    $region4: #{tpu_custom_call.1} parent=1 // pred_region
      %11 = vsyncadd [#allocation3], 0
      %s13 = sshll.u32 %s0, 4
      %s14 = int_to_ptr.hbm [resolvable:$true] %s13
      %s15 = sshll.u32 [#allocation2], 4
      %s16 = int_to_ptr.vmem [resolvable:$true] %s15
      %18 = dma.hbm_to_vmem [thread:$0]  %s14, 256, %s16, [#allocation3]
    $region5: #{tpu_custom_call.1} parent=1 // pred_fallthru
      _
    // Predicated region
    $region6: #{tpu_custom_call.1} parent=1 // pred_check
      _
    $region7: #{tpu_custom_call.1} parent=1 // pred_check_branch
      %20 = sbr.rel (0) target = $region9
    $region8: #{tpu_custom_call.1} parent=1 // pred_region
      %22 = dma.done [#allocation3], 256
    $region9: #{tpu_custom_call.1} parent=1 // pred_fallthru
      _
    %v23 = vld [vmem:[#allocation2] sm:$0xff]
    %v24 = vld [vmem:[#allocation2 + $0x8] sm:$0xff]
    %25 = vst [vmem:[#allocation5] sm:$0xff] %v23
    %26 = vst [vmem:[#allocation5 + $0x8] sm:$0xff] %v24
    // Predicated region
    $region10: #{tpu_custom_call.1} parent=1 // pred_check
      _
    $region11: #{tpu_custom_call.1} parent=1 // pred_check_branch
      %28 = sbr.rel (0) target = $region13
    $region12: #{tpu_custom_call.1} parent=1 // pred_region
      %30 = vsyncadd [#allocation4], 0
      %s32 = sshll.u32 [#allocation5], 4
      %s33 = int_to_ptr.vmem [resolvable:$true] %s32
      %s34 = sshll.u32 %s1, 4
      %s35 = int_to_ptr.hbm [resolvable:$true] %s34
      %37 = dma.vmem_to_hbm [thread:$0]  %s33, 256, %s35, [#allocation4]
    $region13: #{tpu_custom_call.1} parent=1 // pred_fallthru
      _
    // Predicated region
    $region14: #{tpu_custom_call.1} parent=1 // pred_check
      _
    $region15: #{tpu_custom_call.1} parent=1 // pred_check_branch
      %39 = sbr.rel (0) target = $region17
    $region16: #{tpu_custom_call.1} parent=1 // pred_region
      %41 = dma.done [#allocation4], 256
    $region17: #{tpu_custom_call.1} parent=1 // pred_fallthru
      _
    %42 = vsyncpa [#allocation3], 1
    %43 = vsyncpa [#allocation4], 1

</llo_original>
